<compile_context>
chip_gen: v5e
topology: v5e:2x2
jax: 0.10.0
libtpu: 0.0.40
codegen_flags: <defaults>
</compile_context>

<pallas_src>
import math

import jax
import jax.numpy as jnp
from jax import lax
from jax.experimental import pallas as pl
from jax.experimental.pallas import tpu as pltpu


def _topk_pool_kernel(x_ref, adj_ref, w_ref, xo_ref, ao_ref, perm_ref):
    # x_ref   : (1, N, C) node features for this graph
    # adj_ref : (1, N, N) dense adjacency for this graph
    # w_ref   : (1, C)    pre-normalized scoring weight (w / ||w||, hoisted)
    # xo_ref  : (1, K, C) pooled features out
    # ao_ref  : (1, K, K) pooled adjacency out
    # perm_ref: (1, 1, K) selected node indices out (lane-dense)
    f32, bf16 = jnp.float32, jnp.bfloat16
    N, C = x_ref.shape[1], x_ref.shape[2]
    K = xo_ref.shape[1]

    x = x_ref[0]                                    # (N, C) f32
    xb = x.astype(bf16)
    wb = w_ref[...].astype(bf16)                    # (1, C)

    # --- per-node scores, lane-dense; bf16 MXU operands, f32 accumulate --------
    s_row = jnp.tanh(
        lax.dot_general(wb, xb, (((1,), (1,)), ((), ())),
                        preferred_element_type=f32))              # (1, N)

    # Exact (1,N)->(N,1) relayout without a transpose op: mask the diagonal of an
    # (N,N) broadcast and lane-reduce (only exact zeros are added).
    ia = lax.broadcasted_iota(jnp.int32, (N, N), 0)   # sublane index a
    ib = lax.broadcasted_iota(jnp.int32, (N, N), 1)   # lane index b
    diag = ia == ib
    s_col = jnp.sum(jnp.where(diag, s_row, 0.0), axis=1, keepdims=True)  # (N, 1)

    # --- vectorized top-K ranking (replaces host-side lax.top_k) ---------------
    # "b ranked before a"  <=>  s[b] > s[a]  or  (s[b] == s[a] and b < a)
    eq = s_col == s_row                               # [a,b] = (s[a] == s[b])
    before_a = (s_col < s_row) | (eq & (ib < ia))     # contributes to rank of a
    before_b = (s_col > s_row) | (eq & (ia < ib))     # contributes to rank of b
    rank_col = jnp.sum(before_a.astype(f32), axis=1, keepdims=True)   # (N, 1)
    rank_row = jnp.sum(before_b.astype(f32), axis=0, keepdims=True)   # (1, N)

    # One-hot selectors (exact 0/1, safe in bf16): sel[k,i] = sel_t[i,k] = (rank[i]==k)
    k_kn = lax.broadcasted_iota(jnp.int32, (K, N), 0).astype(f32)
    k_nk = lax.broadcasted_iota(jnp.int32, (N, K), 1).astype(f32)
    sel = (rank_row == k_kn).astype(f32)              # (K, N)
    sel_t = (rank_col == k_nk).astype(f32)            # (N, K)
    sel_b = sel.astype(bf16)
    sel_tb = sel_t.astype(bf16)

    # perm[k] = index of the node with rank k (exact integer arithmetic in f32).
    i_nk = lax.broadcasted_iota(jnp.int32, (N, K), 0).astype(f32)
    perm_lane = jnp.sum(sel_t * i_nk, axis=0, keepdims=True)          # (1, K)
    perm_ref[...] = perm_lane.astype(jnp.int32)[None]                 # (1, 1, K)

    # --- pooled node features: x[perm] * score[perm] ---------------------------
    sc_sel = jnp.sum(sel * s_row, axis=1, keepdims=True)              # (K, 1) exact
    x_sel = jnp.dot(sel_b, xb, preferred_element_type=f32)            # (K, C)
    xo_ref[...] = (x_sel * sc_sel)[None].astype(xo_ref.dtype)

    # --- pooled adjacency: ((A + A^T)[perm][:, perm] != 0) + I_K ----------------
    # Row/column gathers are one-hot MXU matmuls; symmetrization commutes with the
    # permutation, so it is done on the small (K,K) result (no NxN transpose).
    # NOTE: adjacency values pass through bf16 (exact for 0/1 adjacencies; for
    # arbitrary float edge weights, values below bf16 range could flush before the
    # != 0 test).
    ab = adj_ref[0].astype(bf16)                                      # (N, N)
    rows = jnp.dot(sel_b, ab, preferred_element_type=f32)             # (K, N)
    p = jnp.dot(rows.astype(bf16), sel_tb, preferred_element_type=f32)  # (K, K)
    a_sym = p + p.T
    rk = lax.broadcasted_iota(jnp.int32, (K, K), 0)
    ck = lax.broadcasted_iota(jnp.int32, (K, K), 1)
    eye = (rk == ck).astype(f32)
    ao_ref[...] = ((a_sym != 0.0).astype(f32) + eye)[None]


def topk_pool_weighted(x, adj, weight, ratio=0.5, return_perm=False):
    B, N, C = x.shape
    K = int(math.ceil(ratio * N))

    # Hoist the weight norm out of the per-graph grid loop (done once here).
    w_n = (weight / jnp.sqrt(jnp.sum(weight * weight))).astype(jnp.float32)

    x_pooled, adj_pooled, perm3 = pl.pallas_call(
        _topk_pool_kernel,
        out_shape=(
            jax.ShapeDtypeStruct((B, K, C), x.dtype),
            jax.ShapeDtypeStruct((B, K, K), jnp.float32),
            jax.ShapeDtypeStruct((B, 1, K), jnp.int32),
        ),
        grid=(B,),
        in_specs=[
            pl.BlockSpec((1, N, C), lambda b: (b, 0, 0)),
            pl.BlockSpec((1, N, N), lambda b: (b, 0, 0)),
            pl.BlockSpec((1, C), lambda b: (0, 0)),
        ],
        out_specs=(
            pl.BlockSpec((1, K, C), lambda b: (b, 0, 0)),
            pl.BlockSpec((1, K, K), lambda b: (b, 0, 0)),
            pl.BlockSpec((1, 1, K), lambda b: (b, 0, 0)),
        ),
        compiler_params=pltpu.CompilerParams(dimension_semantics=("parallel",)),
    )(x, adj, w_n)

    perm = perm3[:, 0, :]
    if B == 1:
        adj_pooled = adj_pooled[0]
    if return_perm:
        return x_pooled, adj_pooled, perm
    return x_pooled, adj_pooled


if __name__ == "__main__":
    B, N, C = 2, 16, 32
    ratio = 0.5

    key = jax.random.PRNGKey(0)
    kx, kadj, kw = jax.random.split(key, 3)

    x = jax.random.normal(kx, (B, N, C), dtype=jnp.float32)

    # random binary adjacency with zero diagonal
    a = (jax.random.uniform(kadj, (B, N, N)) < 0.3).astype(jnp.float32)
    adj = a * (1.0 - jnp.eye(N, dtype=jnp.float32))

    # TopKPooling weight: shape (1, in_channels), uniform(-1/sqrt(C), 1/sqrt(C))
    bound = 1.0 / math.sqrt(C)
    weight = jax.random.uniform(kw, (1, C), minval=-bound, maxval=bound,
                                dtype=jnp.float32)

    x_out, adj_out, perm = topk_pool_weighted(x, adj, weight, ratio=ratio,
                                              return_perm=True)
    jax.block_until_ready((x_out, adj_out, perm))

    K = int(math.ceil(ratio * N))
    assert x_out.shape == (B, K, C)
    assert adj_out.shape == (B, K, K)
    assert perm.shape == (B, K)

    # Plain-JAX reference (same perm) for the pooled features / adjacency.
    norm = jnp.sqrt(jnp.sum(weight * weight))
    x_sel_ref = jnp.take_along_axis(x, perm[..., None], axis=1)            # (B, K, C)
    s_ref = jnp.tanh(
        jnp.einsum("bkc,c->bk", x_sel_ref, weight[0],
                   precision=lax.Precision.HIGHEST) / norm)
    x_ref = x_sel_ref * s_ref[..., None]
    a_sym = adj + jnp.swapaxes(adj, 1, 2)
    a_rows = jnp.take_along_axis(a_sym, perm[..., None], axis=1)           # (B, K, N)
    a_sel = jnp.take_along_axis(a_rows, perm[:, None, :], axis=2)          # (B, K, K)
    adj_ref = (a_sel != 0).astype(jnp.float32) + jnp.eye(K, dtype=jnp.float32)

    # Sanity: perm per graph must be K distinct indices with descending scores.
    s_all = jnp.tanh(jnp.einsum("bnc,c->bn", x, weight[0],
                                precision=lax.Precision.HIGHEST) / norm)
    s_perm = jnp.take_along_axis(s_all, perm, axis=1)
    assert bool(jnp.all(s_perm[:, :-1] >= s_perm[:, 1:] - 1e-3))

    assert jnp.allclose(x_out, x_ref, atol=5e-2, rtol=5e-2)
    assert jnp.allclose(adj_out, adj_ref, atol=1e-6)
    print("KERNEL_OK")
</pallas_src>

<mosaic_0001>
module attributes {stable_mosaic.version = 11 : i64} {
  func.func @_topk_pool_kernel(%arg0: i32, %arg1: memref<1x16x32xf32, #tpu.memory_space<vmem>>, %arg2: memref<1x16x16xf32, #tpu.memory_space<vmem>>, %arg3: memref<1x32xf32, #tpu.memory_space<vmem>>, %arg4: memref<1x8x32xf32, #tpu.memory_space<vmem>>, %arg5: memref<1x8x8xf32, #tpu.memory_space<vmem>>, %arg6: memref<1x1x8xi32, #tpu.memory_space<vmem>>) attributes {dimension_semantics = [#tpu.dimension_semantics<parallel>], iteration_bounds = array<i64: 2>, scalar_prefetch = 0 : i64, scratch_operands = 0 : i64, tpu.core_type = #tpu.core_type<tc>, window_params = [{transform_indices = @transform_0, window_bounds = array<i64: 1, 16, 32>}, {transform_indices = @transform_1, window_bounds = array<i64: 1, 16, 16>}, {pipeline_mode = #tpu.pipeline_mode<synchronous>, transform_indices = @transform_2, window_bounds = array<i64: 1, 32>}, {transform_indices = @transform_3, window_bounds = array<i64: 1, 8, 32>}, {transform_indices = @transform_4, window_bounds = array<i64: 1, 8, 8>}, {transform_indices = @transform_5, window_bounds = array<i64: 1, 1, 8>}]} {
    %c0 = arith.constant 0 : index
    %c0_0 = arith.constant 0 : index
    %c0_1 = arith.constant 0 : index
    %0 = vector.load %arg1[%c0, %c0_0, %c0_1] : memref<1x16x32xf32, #tpu.memory_space<vmem>>, vector<1x16x32xf32>
    %1 = vector.shape_cast %0 : vector<1x16x32xf32> to vector<16x32xf32>
    %2 = arith.truncf %1 : vector<16x32xf32> to vector<16x32xbf16>
    %c0_2 = arith.constant 0 : index
    %c0_3 = arith.constant 0 : index
    %3 = vector.load %arg3[%c0_2, %c0_3] : memref<1x32xf32, #tpu.memory_space<vmem>>, vector<1x32xf32>
    %4 = arith.truncf %3 : vector<1x32xf32> to vector<1x32xbf16>
    %cst = arith.constant dense<0.000000e+00> : vector<1x16xf32>
    %5 = tpu.matmul %4, %2, %cst {dimension_numbers = #tpu.dot_dimension_numbers<[1], [1], [0], [0], [0, 0, 1, 0], [], []>} : vector<1x32xbf16>, vector<16x32xbf16>, vector<1x16xf32> -> vector<1x16xf32>
    %6 = math.tanh %5 : vector<1x16xf32>
    %7 = tpu.iota {dimensions = array<i32: 0>} : vector<16x16xi32>
    %8 = tpu.iota {dimensions = array<i32: 1>} : vector<16x16xi32>
    %9 = arith.cmpi eq, %7, %8 : vector<16x16xi32>
    %cst_4 = arith.constant 0.000000e+00 : f32
    %10 = vector.shape_cast %6 : vector<1x16xf32> to vector<1x16xf32>
    %11 = vector.broadcast %10 : vector<1x16xf32> to vector<16x16xf32>
    %12 = vector.broadcast %cst_4 : f32 to vector<16x16xf32>
    %13 = arith.select %9, %11, %12 : vector<16x16xi1>, vector<16x16xf32>
    %cst_5 = arith.constant dense<0.000000e+00> : vector<16xf32>
    %14 = vector.multi_reduction <add>, %13, %cst_5 [1] : vector<16x16xf32> to vector<16xf32>
    %15 = vector.shape_cast %14 : vector<16xf32> to vector<16x1xf32>
    %16 = vector.broadcast %15 : vector<16x1xf32> to vector<16x16xf32>
    %17 = vector.broadcast %6 : vector<1x16xf32> to vector<16x16xf32>
    %18 = arith.cmpf oeq, %16, %17 : vector<16x16xf32>
    %19 = vector.broadcast %15 : vector<16x1xf32> to vector<16x16xf32>
    %20 = vector.broadcast %6 : vector<1x16xf32> to vector<16x16xf32>
    %21 = arith.cmpf olt, %19, %20 : vector<16x16xf32>
    %22 = arith.cmpi slt, %8, %7 : vector<16x16xi32>
    %23 = arith.andi %18, %22 : vector<16x16xi1>
    %24 = arith.ori %21, %23 : vector<16x16xi1>
    %25 = vector.broadcast %15 : vector<16x1xf32> to vector<16x16xf32>
    %26 = vector.broadcast %6 : vector<1x16xf32> to vector<16x16xf32>
    %27 = arith.cmpf ogt, %25, %26 : vector<16x16xf32>
    %28 = arith.cmpi slt, %7, %8 : vector<16x16xi32>
    %29 = arith.andi %18, %28 : vector<16x16xi1>
    %30 = arith.ori %27, %29 : vector<16x16xi1>
    %31 = arith.extui %24 : vector<16x16xi1> to vector<16x16xi32>
    %32 = arith.sitofp %31 : vector<16x16xi32> to vector<16x16xf32>
    %cst_6 = arith.constant dense<0.000000e+00> : vector<16xf32>
    %33 = vector.multi_reduction <add>, %32, %cst_6 [1] : vector<16x16xf32> to vector<16xf32>
    %34 = vector.shape_cast %33 : vector<16xf32> to vector<16x1xf32>
    %35 = arith.extui %30 : vector<16x16xi1> to vector<16x16xi32>
    %36 = arith.sitofp %35 : vector<16x16xi32> to vector<16x16xf32>
    %cst_7 = arith.constant dense<0.000000e+00> : vector<16xf32>
    %37 = vector.multi_reduction <add>, %36, %cst_7 [0] : vector<16x16xf32> to vector<16xf32>
    %38 = vector.shape_cast %37 : vector<16xf32> to vector<1x16xf32>
    %39 = tpu.iota {dimensions = array<i32: 0>} : vector<8x16xi32>
    %40 = arith.sitofp %39 : vector<8x16xi32> to vector<8x16xf32>
    %41 = tpu.iota {dimensions = array<i32: 1>} : vector<16x8xi32>
    %42 = arith.sitofp %41 : vector<16x8xi32> to vector<16x8xf32>
    %43 = vector.broadcast %38 : vector<1x16xf32> to vector<8x16xf32>
    %44 = arith.cmpf oeq, %43, %40 : vector<8x16xf32>
    %45 = arith.extui %44 : vector<8x16xi1> to vector<8x16xi32>
    %46 = arith.sitofp %45 : vector<8x16xi32> to vector<8x16xf32>
    %47 = vector.broadcast %34 : vector<16x1xf32> to vector<16x8xf32>
    %48 = arith.cmpf oeq, %47, %42 : vector<16x8xf32>
    %49 = arith.extui %48 : vector<16x8xi1> to vector<16x8xi32>
    %50 = arith.sitofp %49 : vector<16x8xi32> to vector<16x8xf32>
    %51 = arith.truncf %46 : vector<8x16xf32> to vector<8x16xbf16>
    %52 = arith.truncf %50 : vector<16x8xf32> to vector<16x8xbf16>
    %53 = tpu.iota {dimensions = array<i32: 0>} : vector<16x8xi32>
    %54 = arith.sitofp %53 : vector<16x8xi32> to vector<16x8xf32>
    %55 = arith.mulf %50, %54 : vector<16x8xf32>
    %cst_8 = arith.constant dense<0.000000e+00> : vector<8xf32>
    %56 = vector.multi_reduction <add>, %55, %cst_8 [0] : vector<16x8xf32> to vector<8xf32>
    %57 = vector.shape_cast %56 : vector<8xf32> to vector<1x8xf32>
    %58 = arith.fptosi %57 : vector<1x8xf32> to vector<1x8xi32>
    %59 = vector.shape_cast %58 : vector<1x8xi32> to vector<1x1x8xi32>
    %c0_9 = arith.constant 0 : index
    %c0_10 = arith.constant 0 : index
    %c0_11 = arith.constant 0 : index
    %60 = vector.load %arg6[%c0_9, %c0_10, %c0_11] : memref<1x1x8xi32, #tpu.memory_space<vmem>>, vector<1x1x8xi32>
    tpu.vector_store %arg6[%c0_9, %c0_10, %c0_11], %59 {strides = array<i32>} : memref<1x1x8xi32, #tpu.memory_space<vmem>>, vector<1x1x8xi32>,
    %61 = vector.broadcast %6 : vector<1x16xf32> to vector<8x16xf32>
    %62 = arith.mulf %46, %61 : vector<8x16xf32>
    %cst_12 = arith.constant dense<0.000000e+00> : vector<8xf32>
    %63 = vector.multi_reduction <add>, %62, %cst_12 [1] : vector<8x16xf32> to vector<8xf32>
    %64 = vector.shape_cast %63 : vector<8xf32> to vector<8x1xf32>
    %cst_13 = arith.constant dense<0.000000e+00> : vector<8x32xf32>
    %65 = tpu.matmul %51, %2, %cst_13 {dimension_numbers = #tpu.dot_dimension_numbers<[1], [0], [0], [1], [0, 0, 1, 1], [], []>} : vector<8x16xbf16>, vector<16x32xbf16>, vector<8x32xf32> -> vector<8x32xf32>
    %66 = vector.broadcast %64 : vector<8x1xf32> to vector<8x32xf32>
    %67 = arith.mulf %65, %66 : vector<8x32xf32>
    %68 = vector.shape_cast %67 : vector<8x32xf32> to vector<1x8x32xf32>
    %c0_14 = arith.constant 0 : index
    %c0_15 = arith.constant 0 : index
    %c0_16 = arith.constant 0 : index
    %69 = vector.load %arg4[%c0_14, %c0_15, %c0_16] : memref<1x8x32xf32, #tpu.memory_space<vmem>>, vector<1x8x32xf32>
    tpu.vector_store %arg4[%c0_14, %c0_15, %c0_16], %68 {strides = array<i32>} : memref<1x8x32xf32, #tpu.memory_space<vmem>>, vector<1x8x32xf32>,
    %c0_17 = arith.constant 0 : index
    %c0_18 = arith.constant 0 : index
    %c0_19 = arith.constant 0 : index
    %70 = vector.load %arg2[%c0_17, %c0_18, %c0_19] : memref<1x16x16xf32, #tpu.memory_space<vmem>>, vector<1x16x16xf32>
    %71 = vector.shape_cast %70 : vector<1x16x16xf32> to vector<16x16xf32>
    %72 = arith.truncf %71 : vector<16x16xf32> to vector<16x16xbf16>
    %cst_20 = arith.constant dense<0.000000e+00> : vector<8x16xf32>
    %73 = tpu.matmul %51, %72, %cst_20 {dimension_numbers = #tpu.dot_dimension_numbers<[1], [0], [0], [1], [0, 0, 1, 1], [], []>} : vector<8x16xbf16>, vector<16x16xbf16>, vector<8x16xf32> -> vector<8x16xf32>
    %74 = arith.truncf %73 : vector<8x16xf32> to vector<8x16xbf16>
    %cst_21 = arith.constant dense<0.000000e+00> : vector<8x8xf32>
    %75 = tpu.matmul %74, %52, %cst_21 {dimension_numbers = #tpu.dot_dimension_numbers<[1], [0], [0], [1], [0, 0, 1, 1], [], []>} : vector<8x16xbf16>, vector<16x8xbf16>, vector<8x8xf32> -> vector<8x8xf32>
    %76 = tpu.transpose %75, [1, 0] : vector<8x8xf32> -> vector<8x8xf32>
    %77 = arith.addf %75, %76 : vector<8x8xf32>
    %78 = tpu.iota {dimensions = array<i32: 0>} : vector<8x8xi32>
    %79 = tpu.iota {dimensions = array<i32: 1>} : vector<8x8xi32>
    %80 = arith.cmpi eq, %78, %79 : vector<8x8xi32>
    %81 = arith.extui %80 : vector<8x8xi1> to vector<8x8xi32>
    %82 = arith.sitofp %81 : vector<8x8xi32> to vector<8x8xf32>
    %cst_22 = arith.constant 0.000000e+00 : f32
    %83 = vector.broadcast %cst_22 : f32 to vector<8x8xf32>
    %84 = arith.cmpf one, %77, %83 : vector<8x8xf32>
    %85 = arith.extui %84 : vector<8x8xi1> to vector<8x8xi32>
    %86 = arith.sitofp %85 : vector<8x8xi32> to vector<8x8xf32>
    %87 = arith.addf %86, %82 : vector<8x8xf32>
    %88 = vector.shape_cast %87 : vector<8x8xf32> to vector<1x8x8xf32>
    %c0_23 = arith.constant 0 : index
    %c0_24 = arith.constant 0 : index
    %c0_25 = arith.constant 0 : index
    %89 = vector.load %arg5[%c0_23, %c0_24, %c0_25] : memref<1x8x8xf32, #tpu.memory_space<vmem>>, vector<1x8x8xf32>
    tpu.vector_store %arg5[%c0_23, %c0_24, %c0_25], %88 {strides = array<i32>} : memref<1x8x8xf32, #tpu.memory_space<vmem>>, vector<1x8x8xf32>,
    return
  }
  func.func @transform_0(%arg0: i32) -> (i32, i32, i32) {
    %c0_i32 = arith.constant 0 : i32
    %c0_i32_0 = arith.constant 0 : i32
    %c0_i32_1 = arith.constant 0 : i32
    return %arg0, %c0_i32, %c0_i32_0 : i32, i32, i32
  }
  func.func @transform_1(%arg0: i32) -> (i32, i32, i32) {
    %c0_i32 = arith.constant 0 : i32
    %c0_i32_0 = arith.constant 0 : i32
    %c0_i32_1 = arith.constant 0 : i32
    return %arg0, %c0_i32, %c0_i32_0 : i32, i32, i32
  }
  func.func @transform_2(%arg0: i32) -> (i32, i32) {
    %c0_i32 = arith.constant 0 : i32
    %c0_i32_0 = arith.constant 0 : i32
    %c0_i32_1 = arith.constant 0 : i32
    return %c0_i32, %c0_i32_0 : i32, i32
  }
  func.func @transform_3(%arg0: i32) -> (i32, i32, i32) {
    %c0_i32 = arith.constant 0 : i32
    %c0_i32_0 = arith.constant 0 : i32
    %c0_i32_1 = arith.constant 0 : i32
    return %arg0, %c0_i32, %c0_i32_0 : i32, i32, i32
  }
  func.func @transform_4(%arg0: i32) -> (i32, i32, i32) {
    %c0_i32 = arith.constant 0 : i32
    %c0_i32_0 = arith.constant 0 : i32
    %c0_i32_1 = arith.constant 0 : i32
    return %arg0, %c0_i32, %c0_i32_0 : i32, i32, i32
  }
  func.func @transform_5(%arg0: i32) -> (i32, i32, i32) {
    %c0_i32 = arith.constant 0 : i32
    %c0_i32_0 = arith.constant 0 : i32
    %c0_i32_1 = arith.constant 0 : i32
    return %arg0, %c0_i32, %c0_i32_0 : i32, i32, i32
  }
}

</mosaic_0001>

<llo_original>
// kernel: tpu_custom_call.1
$region0: #{tpu_custom_call.1}
  #allocation0 [shape = 'u32[]', space=smem, size = 0x4, offset = 0x4, fixed_abs, tag = 'smem constant byte address 0x4 - core index']
  #allocation1 [shape = 'u32[72,128]{1,0:T(1,128)}', space=vmem, size = 0x9000, scoped, tag = 'internal scratch']
  %s0 = inlined_call_operand.hbm [shape: f32[2,16,32], index: 0, kind: input, shape index: {}]
  %s1 = inlined_call_operand.hbm [shape: f32[2,16,16], index: 1, kind: input, shape index: {}]
  %s2 = inlined_call_operand.vmem [shape: f32[1,32], index: 2, kind: input, shape index: {}]
  %s3 = inlined_call_operand.hbm [shape: f32[2,8,32], index: 3, kind: output, shape index: {0}]
  %s4 = inlined_call_operand.hbm [shape: f32[2,8,8], index: 4, kind: output, shape index: {1}]
  %s5 = inlined_call_operand.hbm [shape: s32[2,1,8], index: 5, kind: output, shape index: {2}]
  %6 = xla_tuple %s3, %s4, %s5
  %s7 = sld [smem:[#allocation0]]
  $region69: #{tpu_custom_call.1} parent=0
    _
  %s9 = ssub.s32 1, %s7
  %s10 = scalar_select 0, %s9, %s7
  $region1: #{tpu_custom_call.1} parent=0
    #allocation2 [shape = 'u8[16384]{0}', space=vmem, size = 0x4000, scoped, tag = 'input window, operand 0']
    #allocation3 [shape = 's32[2]{0}', space=sflag, size = 0x8, scoped, tag = 'scoped memory for tpu_custom_call.1']
    #allocation4 [shape = 's32[2]{0}', space=sflag, size = 0x8, scoped, tag = 'scoped memory for tpu_custom_call.1']
    #allocation5 [shape = 'u8[16384]{0}', space=vmem, size = 0x4000, scoped, tag = 'input window, operand 1']
    #allocation6 [shape = 's32[2]{0}', space=sflag, size = 0x8, scoped, tag = 'scoped memory for tpu_custom_call.1']
    #allocation7 [shape = 'u8[8192]{0}', space=vmem, size = 0x2000, scoped, tag = 'output window, operand 0']
    #allocation8 [shape = 'u8[8192]{0}', space=vmem, size = 0x2000, scoped, tag = 'output window, operand 1']
    #allocation9 [shape = 's32[2]{0}', space=sflag, size = 0x8, scoped, tag = 'scoped memory for tpu_custom_call.1']
    #allocation10 [shape = 'u8[1024]{0}', space=vmem, size = 0x400, scoped, tag = 'output window, operand 2']
    %11 = vsyncpa [#allocation3], 0
    %s12 = scalar_lea.sflag [#allocation3], 1
    %13 = vsyncpa %s12, 0
    %14 = vsyncpa [#allocation6], 0
    %s15 = scalar_lea.sflag [#allocation6], 1
    %16 = vsyncpa %s15, 0
    %17 = vsyncpa [#allocation4], 0
    %s18 = scalar_lea.sflag [#allocation4], 1
    %19 = vsyncpa %s18, 0
    %20 = vsyncpa [#allocation9], 0
    %s21 = scalar_lea.sflag [#allocation9], 1
    %22 = vsyncpa %s21, 0
    loop: start=0, step=1, limit=4
    $region2: #{tpu_custom_call.1} parent=1 // loop_pre_header
      _
    $region3: #{tpu_custom_call.1} parent=1 // loop_header
      %s24 = sphi 0, %s28
      %p25 = scmp.ge.s32.totalorder %s24, 4
      %s34 = sphi 0, %s36
      %s37 = sphi 0, %s34
      %s38 = sphi 0, %s37
      %s54 = sphi 0, %s38
      %s60 = sphi 0, %s62
      %s63 = sphi 0, %s60
      %s64 = sphi 0, %s63
      %s80 = sphi 0, %s64
      %s84 = sphi 0, %s84
      %s86 = sphi 0, %s84
      %s87 = sphi 0, %s86
      %s101 = sphi 0, %s87
      %s107 = sphi 0, %s109
      %s110 = sphi 0, %s107
      %s111 = sphi 0, %s110
      %s127 = sphi 0, %s111
      %s133 = sphi 0, %s135
      %s136 = sphi 0, %s133
      %s137 = sphi 0, %s136
      %s153 = sphi 0, %s137
      %s159 = sphi 0, %s161
      %s162 = sphi 0, %s159
      %s163 = sphi 0, %s162
      %s179 = sphi 0, %s163
    $region4: #{tpu_custom_call.1} parent=1 // loop_header_branch
      %27 = sbr.rel (%p25) target = $region8
    $region5: #{tpu_custom_call.1} parent=1 // loop_body
      %s29 = ssub.s32 %s24, 1
      %s30 = ssub.s32 %s24, 2
      %s31 = sadd.s32 %s24, 1
      %s32 = ssub.s32 %s24, %s31
      %p33 = scmp.eq.s32.totalorder %s32, 0
      %s35 = sadd.s32 %s34, 1
      %s36 = scalar_select %p33, %s34, %s35
      %p39 = pneg %p33
      %p40 = scmp.eq.s32.totalorder %s24, 1
      %p41 = por %p39, %p40
      %p42 = scmp.ne.s32.totalorder %s34, %s37
      %p43 = scmp.eq.s32.totalorder %s24, 0
      %p44 = por %p42, %p43
      %p45 = scmp.ne.s32.totalorder %s34, %s37
      %p46 = scmp.eq.s32.totalorder %s29, 1
      %p47 = por %p45, %p46
      %p48 = scmp.ne.s32.totalorder %s37, %s38
      %p49 = scmp.eq.s32.totalorder %s29, 0
      %p50 = por %p48, %p49
      %p51 = scmp.ne.s32.totalorder %s37, %s38
      %p52 = scmp.eq.s32.totalorder %s30, 1
      %p53 = por %p51, %p52
      %p55 = scmp.ne.s32.totalorder %s38, %s54
      %p56 = scmp.eq.s32.totalorder %s30, 0
      %p57 = por %p55, %p56
      %s58 = ssub.s32 %s24, %s31
      %p59 = scmp.eq.s32.totalorder %s58, 0
      %s61 = sadd.s32 %s60, 1
      %s62 = scalar_select %p59, %s60, %s61
      %p65 = pneg %p59
      %p66 = scmp.eq.s32.totalorder %s24, 1
      %p67 = por %p65, %p66
      %p68 = scmp.ne.s32.totalorder %s60, %s63
      %p69 = scmp.eq.s32.totalorder %s24, 0
      %p70 = por %p68, %p69
      %p71 = scmp.ne.s32.totalorder %s60, %s63
      %p72 = scmp.eq.s32.totalorder %s29, 1
      %p73 = por %p71, %p72
      %p74 = scmp.ne.s32.totalorder %s63, %s64
      %p75 = scmp.eq.s32.totalorder %s29, 0
      %p76 = por %p74, %p75
      %p77 = scmp.ne.s32.totalorder %s63, %s64
      %p78 = scmp.eq.s32.totalorder %s30, 1
      %p79 = por %p77, %p78
      %p81 = scmp.ne.s32.totalorder %s64, %s80
      %p82 = scmp.eq.s32.totalorder %s30, 0
      %p83 = por %p81, %p82
      %s85 = sadd.s32 %s84, 1
      %p88 = scmp.eq.s32.totalorder %s24, 1
      %p89 = scmp.ne.s32.totalorder %s84, %s86
      %p90 = scmp.eq.s32.totalorder %s24, 0
      %p91 = por %p89, %p90
      %p92 = scmp.ne.s32.totalorder %s84, %s86
      %p93 = scmp.eq.s32.totalorder %s29, 1
      %p94 = por %p92, %p93
      %p95 = scmp.ne.s32.totalorder %s86, %s87
      %p96 = scmp.eq.s32.totalorder %s29, 0
      %p97 = por %p95, %p96
      %p98 = scmp.ne.s32.totalorder %s86, %s87
      %p99 = scmp.eq.s32.totalorder %s30, 1
      %p100 = por %p98, %p99
      %p102 = scmp.ne.s32.totalorder %s87, %s101
      %p103 = scmp.eq.s32.totalorder %s30, 0
      %p104 = por %p102, %p103
      %s105 = ssub.s32 %s24, %s31
      %p106 = scmp.eq.s32.totalorder %s105, 0
      %s108 = sadd.s32 %s107, 1
      %s109 = scalar_select %p106, %s107, %s108
      %p112 = pneg %p106
      %p113 = scmp.eq.s32.totalorder %s24, 1
      %p114 = por %p112, %p113
      %p115 = scmp.ne.s32.totalorder %s107, %s110
      %p116 = scmp.eq.s32.totalorder %s24, 0
      %p117 = por %p115, %p116
      %p118 = scmp.ne.s32.totalorder %s107, %s110
      %p119 = scmp.eq.s32.totalorder %s29, 1
      %p120 = por %p118, %p119
      %p121 = scmp.ne.s32.totalorder %s110, %s111
      %p122 = scmp.eq.s32.totalorder %s29, 0
      %p123 = por %p121, %p122
      %p124 = scmp.ne.s32.totalorder %s110, %s111
      %p125 = scmp.eq.s32.totalorder %s30, 1
      %p126 = por %p124, %p125
      %p128 = scmp.ne.s32.totalorder %s111, %s127
      %p129 = scmp.eq.s32.totalorder %s30, 0
      %p130 = por %p128, %p129
      %s131 = ssub.s32 %s24, %s31
      %p132 = scmp.eq.s32.totalorder %s131, 0
      %s134 = sadd.s32 %s133, 1
      %s135 = scalar_select %p132, %s133, %s134
      %p138 = pneg %p132
      %p139 = scmp.eq.s32.totalorder %s24, 1
      %p140 = por %p138, %p139
      %p141 = scmp.ne.s32.totalorder %s133, %s136
      %p142 = scmp.eq.s32.totalorder %s24, 0
      %p143 = por %p141, %p142
      %p144 = scmp.ne.s32.totalorder %s133, %s136
      %p145 = scmp.eq.s32.totalorder %s29, 1
      %p146 = por %p144, %p145
      %p147 = scmp.ne.s32.totalorder %s136, %s137
      %p148 = scmp.eq.s32.totalorder %s29, 0
      %p149 = por %p147, %p148
      %p150 = scmp.ne.s32.totalorder %s136, %s137
      %p151 = scmp.eq.s32.totalorder %s30, 1
      %p152 = por %p150, %p151
      %p154 = scmp.ne.s32.totalorder %s137, %s153
      %p155 = scmp.eq.s32.totalorder %s30, 0
      %p156 = por %p154, %p155
      %s157 = ssub.s32 %s24, %s31
      %p158 = scmp.eq.s32.totalorder %s157, 0
      %s160 = sadd.s32 %s159, 1
      %s161 = scalar_select %p158, %s159, %s160
      %p164 = pneg %p158
      %p165 = scmp.eq.s32.totalorder %s24, 1
      %p166 = por %p164, %p165
      %p167 = scmp.ne.s32.totalorder %s159, %s162
      %p168 = scmp.eq.s32.totalorder %s24, 0
      %p169 = por %p167, %p168
      %p170 = scmp.ne.s32.totalorder %s159, %s162
      %p171 = scmp.eq.s32.totalorder %s29, 1
      %p172 = por %p170, %p171
      %p173 = scmp.ne.s32.totalorder %s162, %s163
      %p174 = scmp.eq.s32.totalorder %s29, 0
      %p175 = por %p173, %p174
      %p176 = scmp.ne.s32.totalorder %s162, %s163
      %p177 = scmp.eq.s32.totalorder %s30, 1
      %p178 = por %p176, %p177
      %p180 = scmp.ne.s32.totalorder %s163, %s179
      %p181 = scmp.eq.s32.totalorder %s30, 0
      %p182 = por %p180, %p181
      %p183 = scmp.le.s32.totalorder 1, %s24
      %p184 = scmp.lt.s32.totalorder %s24, 3
      %p185 = pnand %p183, %p184
      %p186 = pneg %p185
      // Predicated region
      $region9: #{tpu_custom_call.1} parent=5 // pred_check
        _
      $region10: #{tpu_custom_call.1} parent=5 // pred_check_branch
        %188 = sbr.rel (%p185) target = $region12
      $region11: #{tpu_custom_call.1} parent=5 // pred_region
        %s189 = ssub.s32 %s24, 1
        // Predicated region
        $region13: #{tpu_custom_call.1} parent=11 // pred_check
          %p190 = pneg %p97
        $region14: #{tpu_custom_call.1} parent=11 // pred_check_branch
          %192 = sbr.rel (%p190) target = $region16
        $region15: #{tpu_custom_call.1} parent=11 // pred_region
          _
        $region16: #{tpu_custom_call.1} parent=11 // pred_fallthru
          _
      $region12: #{tpu_custom_call.1} parent=5 // pred_fallthru
        _
      %p193 = scmp.lt.s32.totalorder %s24, 2
      // Predicated region
      $region17: #{tpu_custom_call.1} parent=5 // pred_check
        %p194 = pneg %p193
      $region18: #{tpu_custom_call.1} parent=5 // pred_check_branch
        %196 = sbr.rel (%p194) target = $region20
      $region19: #{tpu_custom_call.1} parent=5 // pred_region
        // Predicated region
        $region21: #{tpu_custom_call.1} parent=19 // pred_check
          %p197 = pneg %p44
        $region22: #{tpu_custom_call.1} parent=19 // pred_check_branch
          %199 = sbr.rel (%p197) target = $region24
        $region23: #{tpu_custom_call.1} parent=19 // pred_region
          %s200 = sand.u32 %s34, 1
          %s201 = scalar_lea.sflag [#allocation3], %s200
          %s202 = sand.u32 %s34, 1
          %s203 = smul.addr %s202, 16
          %s204 = scalar_lea.vmem [#allocation2], %s203
          %206 = vsyncadd %s201, 0
          %s207 = smul.addr %s24, 2
          %s208 = smul.addr %s207, 8
          %s209 = scalar_lea.hbm %s0, %s208
          %s210 = sshll.u32 %s209, 4
          %s211 = int_to_ptr.hbm [resolvable:$true] %s210
          %s212 = sshll.u32 %s204, 4
          %s213 = int_to_ptr.vmem [resolvable:$true] %s212
          %218 = dma.hbm_to_vmem [thread:$0]  %s211, 256, %s213, %s201, 128, 128, 8
        $region24: #{tpu_custom_call.1} parent=19 // pred_fallthru
          _
        // Predicated region
        $region25: #{tpu_custom_call.1} parent=19 // pred_check
          %p219 = pneg %p70
        $region26: #{tpu_custom_call.1} parent=19 // pred_check_branch
          %221 = sbr.rel (%p219) target = $region28
        $region27: #{tpu_custom_call.1} parent=19 // pred_region
          %s222 = sand.u32 %s60, 1
          %s223 = scalar_lea.sflag [#allocation6], %s222
          %s224 = sand.u32 %s60, 1
          %s225 = smul.addr %s224, 16
          %s226 = scalar_lea.vmem [#allocation5], %s225
          %228 = vsyncadd %s223, 0
          %s229 = smul.addr %s24, 2
          %s230 = smul.addr %s229, 8
          %s231 = scalar_lea.hbm %s1, %s230
          %s232 = sshll.u32 %s231, 4
          %s233 = int_to_ptr.hbm [resolvable:$true] %s232
          %s234 = sshll.u32 %s226, 4
          %s235 = int_to_ptr.vmem [resolvable:$true] %s234
          %240 = dma.hbm_to_vmem [thread:$0]  %s233, 256, %s235, %s223, 128, 128, 8
        $region28: #{tpu_custom_call.1} parent=19 // pred_fallthru
          _
      $region20: #{tpu_custom_call.1} parent=5 // pred_fallthru
        _
      %p241 = scmp.le.s32.totalorder 1, %s24
      %p242 = scmp.lt.s32.totalorder %s24, 3
      %p243 = pnand %p241, %p242
      %p244 = pneg %p243
      // Predicated region
      $region29: #{tpu_custom_call.1} parent=5 // pred_check
        _
      $region30: #{tpu_custom_call.1} parent=5 // pred_check_branch
        %246 = sbr.rel (%p243) target = $region32
      $region31: #{tpu_custom_call.1} parent=5 // pred_region
        %s247 = ssub.s32 %s24, 1
        %s248 = sand.u32 %s37, 1
        %s249 = scalar_lea.sflag [#allocation3], %s248
        %s250 = sand.u32 %s37, 1
        %s251 = smul.addr %s250, 16
        %s252 = scalar_lea.vmem [#allocation2], %s251
        // Predicated region
        $region33: #{tpu_custom_call.1} parent=31 // pred_check
          %p253 = pneg %p50
        $region34: #{tpu_custom_call.1} parent=31 // pred_check_branch
          %255 = sbr.rel (%p253) target = $region36
        $region35: #{tpu_custom_call.1} parent=31 // pred_region
          %257 = dma.done %s249, 256
        $region36: #{tpu_custom_call.1} parent=31 // pred_fallthru
          _
        %s258 = sand.u32 %s63, 1
        %s259 = scalar_lea.sflag [#allocation6], %s258
        %s260 = sand.u32 %s63, 1
        %s261 = smul.addr %s260, 16
        %s262 = scalar_lea.vmem [#allocation5], %s261
        // Predicated region
        $region37: #{tpu_custom_call.1} parent=31 // pred_check
          %p263 = pneg %p76
        $region38: #{tpu_custom_call.1} parent=31 // pred_check_branch
          %265 = sbr.rel (%p263) target = $region40
        $region39: #{tpu_custom_call.1} parent=31 // pred_region
          %267 = dma.done %s259, 256
        $region40: #{tpu_custom_call.1} parent=31 // pred_fallthru
          _
        %s268 = sand.u32 %s37, 1
        %s269 = scalar_lea.sflag [#allocation3], %s268
        %s270 = sand.u32 %s37, 1
        %s271 = smul.addr %s270, 16
        %s272 = scalar_lea.vmem [#allocation2], %s271
        %p273 = pneg %p50
        %p274 = pneg %p47
        %s275 = sand.u32 %s63, 1
        %s276 = scalar_lea.sflag [#allocation6], %s275
        %s277 = sand.u32 %s63, 1
        %s278 = smul.addr %s277, 16
        %s279 = scalar_lea.vmem [#allocation5], %s278
        %p280 = pneg %p76
        %p281 = pneg %p73
        %p282 = pneg %p97
        %p283 = pneg %p94
        %p284 = pneg %p123
        %p285 = pneg %p120
        %s286 = sand.u32 %s110, 1
        %s287 = scalar_lea.sflag [#allocation4], %s286
        %s288 = sand.u32 %s110, 1
        %s289 = smul.addr %s288, 8
        %s290 = scalar_lea.vmem [#allocation7], %s289
        %p291 = pneg %p149
        %p292 = pneg %p146
        %s293 = sand.u32 %s29, 1
        %s294 = scalar_lea.sflag [#allocation9], %s293
        %s295 = sand.u32 %s136, 1
        %s296 = smul.addr %s295, 8
        %s297 = scalar_lea.vmem [#allocation8], %s296
        %p298 = pneg %p175
        %p299 = pneg %p172
        %s300 = sand.u32 %s29, 1
        %s301 = scalar_lea.sflag [#allocation9], %s300
        %s302 = sand.u32 %s162, 1
        %s303 = scalar_lea.vmem [#allocation10], %s302
        %v305 = vld [vmem:[%s252] sm:$0xff]
        %v306 = vld [vmem:[%s252 + $0x8] sm:$0xff]
        %v307 = vpack.c.bf16 %v306, %v305
        %v308 = vld [vmem:[%s2] sm:$0x1]
        %v309 = vpack.c.bf16 %v308, %v308
        %vm310 = vcmask 261120
        %v312 = vsel %vm310, %v309, 0
        %v315 = vsel %vm310, %v307, 0
        %317 = vmatpush.bf16.xpose.msra.mxu0 0
        %318 = vmatpush.bf16.xpose.msra.mxu0 0
        %319 = vmatpush.bf16.xpose.msra.mxu0 0
        %320 = vmatpush.bf16.xpose.msra.mxu0 0
        %321 = vmatpush.bf16.xpose.msra.mxu0 0
        %322 = vmatpush.bf16.xpose.msra.mxu0 0
        %323 = vmatpush.bf16.xpose.msra.mxu0 0
        %324 = vmatpush.bf16.xpose.msra.mxu0 %v315
        %325 = vmatmul.bf16.gmra.mxu0 %v312
        %v326 = vpop.f32.mrf.mxu0
        %v327 = vadd.f32 0.0, %v326
        %v328 = vpop.f32.mrf.mxu0
        %329 = vdwg.mxu0
        %v330 = vtanh.pop %v327
        %v331 = vlaneseq
        %v332 = vshrl.u32 %v331, 7
        %v333 = vadd.s32 %v332, 8
        %v334 = vlaneseq
        %v335 = vand.u32 %v334, 127
        %vm336 = vcmp.eq.s32.totalorder %v332, %v335
        %vm337 = vcmp.eq.s32.totalorder %v333, %v335
        %v338 = vperm.slane %v330, 0
        %v339 = vsel %vm336, %v338, 0.0
        %v340 = vsel %vm337, %v338, 0.0
        %vm341 = vcmask 130048
        %v342 = vsel %vm341, %v339, 0.0
        %343 = vadd.xlane.f32.xlu0 %v342
        %v344 = vpop.xlane.xlu0 %343
        %v345 = vsel %vm341, %v340, 0.0
        %346 = vadd.xlane.f32.xlu0 %v345
        %v347 = vpop.xlane.xlu0 %346
        %vm348 = vcmp.eq.f32.partialorder %v344, %v338
        %vm349 = vcmp.eq.f32.partialorder %v347, %v338
        %vm350 = vcmp.lt.f32.partialorder %v344, %v338
        %vm351 = vcmp.lt.f32.partialorder %v347, %v338
        %vm352 = vcmp.lt.s32.totalorder %v335, %v332
        %vm353 = vcmp.lt.s32.totalorder %v335, %v333
        %vm354 = vmand %vm348, %vm352
        %vm355 = vmand %vm349, %vm353
        %vm356 = vmor %vm350, %vm354
        %vm357 = vmor %vm351, %vm355
        %vm358 = vcmp.gt.f32.partialorder %v344, %v338
        %vm359 = vcmp.gt.f32.partialorder %v347, %v338
        %vm360 = vcmp.lt.s32.totalorder %v332, %v335
        %vm361 = vcmp.lt.s32.totalorder %v333, %v335
        %vm362 = vmand %vm348, %vm360
        %vm363 = vmand %vm349, %vm361
        %vm364 = vmor %vm358, %vm362
        %vm365 = vmor %vm359, %vm363
        %v366 = vsel %vm356, 1, 0
        %v367 = vsel %vm357, 1, 0
        %v368 = vcvt.s32.f32 %v366
        %v369 = vcvt.s32.f32 %v367
        %v370 = vsel %vm341, %v368, 0.0
        %371 = vadd.xlane.f32.xlu0 %v370
        %v372 = vpop.xlane.xlu0 %371
        %v373 = vsel %vm341, %v369, 0.0
        %374 = vadd.xlane.f32.xlu0 %v373
        %v375 = vpop.xlane.xlu0 %374
        %v376 = vsel %vm364, 1, 0
        %v377 = vsel %vm365, 1, 0
        %v378 = vcvt.s32.f32 %v376
        %v379 = vcvt.s32.f32 %v377
        %v380 = vsel %vm341, %v378, 0.0
        %v381 = vsel %vm341, %v379, 0.0
        %v382 = vadd.f32 %v380, %v381
        %v383 = vrot.slane %v382, 4
        %v384 = vadd.f32 %v382, %v383
        %v385 = vrot.slane %v384, 2
        %v386 = vadd.f32 %v384, %v385
        %v387 = vrot.slane %v386, 1
        %v388 = vadd.f32 %v386, %v387
        %v389 = vcvt.s32.f32 %v332
        %v390 = vcvt.s32.f32 %v335
        %vm391 = vcmp.eq.f32.partialorder %v388, %v389
        %v392 = vsel %vm391, 1, 0
        %v393 = vcvt.s32.f32 %v392
        %vm394 = vcmp.eq.f32.partialorder %v372, %v390
        %vm395 = vcmp.eq.f32.partialorder %v375, %v390
        %v396 = vsel %vm394, 1, 0
        %v397 = vsel %vm395, 1, 0
        %v398 = vcvt.s32.f32 %v396
        %v399 = vcvt.s32.f32 %v397
        %v400 = vpack.c.bf16 %v393, %v393
        %v401 = vpack.c.bf16 %v399, %v398
        %v402 = vcvt.s32.f32 %v333
        %v403 = vmul.f32 %v398, %v389
        %v404 = vmul.f32 %v399, %v402
        %vm405 = vcmask 64512
        %v406 = vsel %vm405, %v403, 0.0
        %v407 = vsel %vm405, %v404, 0.0
        %v408 = vadd.f32 %v406, %v407
        %v409 = vrot.slane %v408, 4
        %v410 = vadd.f32 %v408, %v409
        %v411 = vrot.slane %v410, 2
        %v412 = vadd.f32 %v410, %v411
        %v413 = vrot.slane %v412, 1
        %v414 = vadd.f32 %v412, %v413
        %v415 = vcvt.f32.s32.to.zero.pseudo %v414
        %vm416 = vcmask 57344
        %417 = vst.msk [vmem:[%s303] sm:$0x1] %vm416, %v415
        %v418 = vmul.f32 %v393, %v338
        %v419 = vsel %vm341, %v418, 0.0
        %420 = vadd.xlane.f32.xlu0 %v419
        %v421 = vpop.xlane.xlu0 %420
        %v423 = vsel %vm341, %v400, 0
        %425 = vmatpush.bf16.msra.mxu0 0
        %426 = vmatpush.bf16.msra.mxu0 0
        %427 = vmatpush.bf16.msra.mxu0 0
        %428 = vmatpush.bf16.msra.mxu0 0
        %429 = vmatpush.bf16.msra.mxu0 0
        %430 = vmatpush.bf16.msra.mxu0 0
        %431 = vmatpush.bf16.msra.mxu0 0
        %432 = vmatpush.bf16.msra.mxu0 %v307
        %433 = vmatmul.bf16.gmra.mxu0 %v423
        %v434 = vpop.f32.mrf.mxu0
        %v435 = vadd.f32 0.0, %v434
        %v436 = vpop.f32.mrf.mxu0
        %437 = vdwg.mxu0
        %v438 = vmul.f32 %v435, %v421
        %439 = vst.msk [vmem:[%s290] sm:$0xff] %vm310, %v438
        %v440 = vld [vmem:[%s262] sm:$0xff]
        %v441 = vld [vmem:[%s262 + $0x8] sm:$0xff]
        %v442 = vpack.c.bf16 %v441, %v440
        %443 = vmatpush.bf16.msra.mxu0 0
        %444 = vmatpush.bf16.msra.mxu0 0
        %445 = vmatpush.bf16.msra.mxu0 0
        %446 = vmatpush.bf16.msra.mxu0 0
        %447 = vmatpush.bf16.msra.mxu0 0
        %448 = vmatpush.bf16.msra.mxu0 0
        %449 = vmatpush.bf16.msra.mxu0 0
        %450 = vmatpush.bf16.msra.mxu0 %v442
        %451 = vmatmul.bf16.gmra.mxu0 %v423
        %v452 = vpop.f32.mrf.mxu0
        %v453 = vadd.f32 0.0, %v452
        %v454 = vpop.f32.mrf.mxu0
        %455 = vdwg.mxu0
        %v456 = vpack.c.bf16 %v453, %v453
        %v458 = vsel %vm341, %v456, 0
        %460 = vmatpush.bf16.msra.mxu0 0
        %461 = vmatpush.bf16.msra.mxu0 0
        %462 = vmatpush.bf16.msra.mxu0 0
        %463 = vmatpush.bf16.msra.mxu0 0
        %464 = vmatpush.bf16.msra.mxu0 0
        %465 = vmatpush.bf16.msra.mxu0 0
        %466 = vmatpush.bf16.msra.mxu0 0
        %467 = vmatpush.bf16.msra.mxu0 %v401
        %468 = vmatmul.bf16.gmra.mxu0 %v458
        %v469 = vpop.f32.mrf.mxu0
        %v470 = vadd.f32 0.0, %v469
        %v471 = vpop.f32.mrf.mxu0
        %472 = vdwg.mxu0
        %473 = vxpose.xlu0.b32.start [1/16] %v470, 128
        %474 = vxpose.xlu0.b32.cont [2/16] 0.0, 128
        %475 = vxpose.xlu0.b32.cont [3/16] 0.0, 128
        %476 = vxpose.xlu0.b32.cont [4/16] 0.0, 128
        %477 = vxpose.xlu0.b32.cont [5/16] 0.0, 128
        %478 = vxpose.xlu0.b32.cont [6/16] 0.0, 128
        %479 = vxpose.xlu0.b32.cont [7/16] 0.0, 128
        %480 = vxpose.xlu0.b32.cont [8/16] 0.0, 128
        %481 = vxpose.xlu0.b32.cont [9/16] 0.0, 128
        %482 = vxpose.xlu0.b32.cont [10/16] 0.0, 128
        %483 = vxpose.xlu0.b32.cont [11/16] 0.0, 128
        %484 = vxpose.xlu0.b32.cont [12/16] 0.0, 128
        %485 = vxpose.xlu0.b32.cont [13/16] 0.0, 128
        %486 = vxpose.xlu0.b32.cont [14/16] 0.0, 128
        %487 = vxpose.xlu0.b32.cont [15/16] 0.0, 128
        %488 = vxpose.xlu0.b32.end [16/16] 0.0, 128
        %v489 = vpop.trf.xlu0
        %v490 = vpop.trf.xlu0
        %v491 = vpop.trf.xlu0
        %v492 = vpop.trf.xlu0
        %v493 = vpop.trf.xlu0
        %v494 = vpop.trf.xlu0
        %v495 = vpop.trf.xlu0
        %v496 = vpop.trf.xlu0
        %v497 = vpop.trf.xlu0
        %v498 = vpop.trf.xlu0
        %v499 = vpop.trf.xlu0
        %v500 = vpop.trf.xlu0
        %v501 = vpop.trf.xlu0
        %v502 = vpop.trf.xlu0
        %v503 = vpop.trf.xlu0
        %v504 = vpop.trf.xlu0
        %v505 = vadd.f32 %v470, %v489
        %v506 = vsel %vm336, 1, 0
        %v507 = vcvt.s32.f32 %v506
        %vm508 = vcmp.ne.f32.partialorder %v505, 0.0
        %v509 = vsel %vm508, 1, 0
        %v510 = vcvt.s32.f32 %v509
        %v511 = vadd.f32 %v510, %v507
        %512 = vst.msk [vmem:[%s297] sm:$0xff] %vm405, %v511
        %s513 = sand.u32 %s110, 1
        %s514 = scalar_lea.sflag [#allocation4], %s513
        %s515 = sand.u32 %s110, 1
        %s516 = smul.addr %s515, 8
        %s517 = scalar_lea.vmem [#allocation7], %s516
        %s518 = sand.u32 %s29, 1
        %s519 = scalar_lea.sflag [#allocation9], %s518
        %s520 = sand.u32 %s136, 1
        %s521 = smul.addr %s520, 8
        %s522 = scalar_lea.vmem [#allocation8], %s521
        %s523 = sand.u32 %s29, 1
        %s524 = scalar_lea.sflag [#allocation9], %s523
        %s525 = sand.u32 %s162, 1
        %s526 = scalar_lea.vmem [#allocation10], %s525
        // Predicated region
        $region41: #{tpu_custom_call.1} parent=31 // pred_check
          %p527 = pneg %p120
        $region42: #{tpu_custom_call.1} parent=31 // pred_check_branch
          %529 = sbr.rel (%p527) target = $region44
        $region43: #{tpu_custom_call.1} parent=31 // pred_region
          %531 = vsyncadd %s514, 0
          %s532 = smul.addr %s29, 8
          %s533 = scalar_lea.hbm %s3, %s532
          %s535 = sshll.u32 %s517, 4
          %s536 = int_to_ptr.vmem [resolvable:$true] %s535
          %s537 = sshll.u32 %s533, 4
          %s538 = int_to_ptr.hbm [resolvable:$true] %s537
          %540 = dma.vmem_to_hbm [thread:$0]  %s536, 128, %s538, %s514
        $region44: #{tpu_custom_call.1} parent=31 // pred_fallthru
          _
        // Predicated region
        $region45: #{tpu_custom_call.1} parent=31 // pred_check
          %p541 = pneg %p146
        $region46: #{tpu_custom_call.1} parent=31 // pred_check_branch
          %543 = sbr.rel (%p541) target = $region48
        $region47: #{tpu_custom_call.1} parent=31 // pred_region
          %545 = vsyncadd %s519, 0
          %s546 = smul.addr %s29, 8
          %s547 = scalar_lea.hbm %s4, %s546
          %s549 = sshll.u32 %s522, 4
          %s550 = int_to_ptr.vmem [resolvable:$true] %s549
          %s551 = sshll.u32 %s547, 4
          %s552 = int_to_ptr.hbm [resolvable:$true] %s551
          %554 = dma.vmem_to_hbm [thread:$0]  %s550, 128, %s552, %s519
        $region48: #{tpu_custom_call.1} parent=31 // pred_fallthru
          _
        // Predicated region
        $region49: #{tpu_custom_call.1} parent=31 // pred_check
          %p555 = pneg %p172
        $region50: #{tpu_custom_call.1} parent=31 // pred_check_branch
          %557 = sbr.rel (%p555) target = $region52
        $region51: #{tpu_custom_call.1} parent=31 // pred_region
          %559 = vsyncadd %s524, 0
          %s560 = scalar_lea.hbm %s5, %s29
          %s562 = sshll.u32 %s526, 4
          %s563 = int_to_ptr.vmem [resolvable:$true] %s562
          %s564 = sshll.u32 %s560, 4
          %s565 = int_to_ptr.hbm [resolvable:$true] %s564
          %567 = dma.vmem_to_hbm [thread:$0]  %s563, 16, %s565, %s524
        $region52: #{tpu_custom_call.1} parent=31 // pred_fallthru
          _
      $region32: #{tpu_custom_call.1} parent=5 // pred_fallthru
        _
      %p568 = scmp.le.s32.totalorder 2, %s24
      // Predicated region
      $region53: #{tpu_custom_call.1} parent=5 // pred_check
        %p569 = pneg %p568
      $region54: #{tpu_custom_call.1} parent=5 // pred_check_branch
        %571 = sbr.rel (%p569) target = $region56
      $region55: #{tpu_custom_call.1} parent=5 // pred_region
        %s572 = ssub.s32 %s24, 2
        // Predicated region
        $region57: #{tpu_custom_call.1} parent=55 // pred_check
          %p573 = pneg %p126
        $region58: #{tpu_custom_call.1} parent=55 // pred_check_branch
          %575 = sbr.rel (%p573) target = $region60
        $region59: #{tpu_custom_call.1} parent=55 // pred_region
          %s576 = sand.u32 %s111, 1
          %s577 = scalar_lea.sflag [#allocation4], %s576
          %s578 = sand.u32 %s111, 1
          %s579 = smul.addr %s578, 8
          %s580 = scalar_lea.vmem [#allocation7], %s579
          %582 = dma.done %s577, 128
        $region60: #{tpu_custom_call.1} parent=55 // pred_fallthru
          _
        // Predicated region
        $region61: #{tpu_custom_call.1} parent=55 // pred_check
          %p583 = pneg %p152
        $region62: #{tpu_custom_call.1} parent=55 // pred_check_branch
          %585 = sbr.rel (%p583) target = $region64
        $region63: #{tpu_custom_call.1} parent=55 // pred_region
          %s586 = sand.u32 %s30, 1
          %s587 = scalar_lea.sflag [#allocation9], %s586
          %s588 = sand.u32 %s137, 1
          %s589 = smul.addr %s588, 8
          %s590 = scalar_lea.vmem [#allocation8], %s589
          %592 = dma.done %s587, 128
        $region64: #{tpu_custom_call.1} parent=55 // pred_fallthru
          _
        // Predicated region
        $region65: #{tpu_custom_call.1} parent=55 // pred_check
          %p593 = pneg %p178
        $region66: #{tpu_custom_call.1} parent=55 // pred_check_branch
          %595 = sbr.rel (%p593) target = $region68
        $region67: #{tpu_custom_call.1} parent=55 // pred_region
          %s596 = sand.u32 %s30, 1
          %s597 = scalar_lea.sflag [#allocation9], %s596
          %s598 = sand.u32 %s163, 1
          %s599 = scalar_lea.vmem [#allocation10], %s598
          %601 = dma.done %s597, 16
        $region68: #{tpu_custom_call.1} parent=55 // pred_fallthru
          _
      $region56: #{tpu_custom_call.1} parent=5 // pred_fallthru
        _
    $region6: #{tpu_custom_call.1} parent=1 // loop_footer
      %s28 = sadd.s32 1, %s24
    $region7: #{tpu_custom_call.1} parent=1 // loop_footer_branch
      %23 = sbr.rel target = $region3
    $region8: #{tpu_custom_call.1} parent=1 // loop_exit
      _
    %602 = vsyncpa [#allocation3], 1
    %s603 = scalar_lea.sflag [#allocation3], 1
    %604 = vsyncpa %s603, 1
    %605 = vsyncpa [#allocation6], 1
    %s606 = scalar_lea.sflag [#allocation6], 1
    %607 = vsyncpa %s606, 1
    %608 = vsyncpa [#allocation4], 1
    %s609 = scalar_lea.sflag [#allocation4], 1
    %610 = vsyncpa %s609, 1
    %611 = vsyncpa [#allocation9], 1
    %s612 = scalar_lea.sflag [#allocation9], 1
    %613 = vsyncpa %s612, 1

</llo_original>
